<compile_context>
chip_gen: v5e
topology: v5e:2x2
jax: 0.10.0
libtpu: 0.0.40
codegen_flags: <defaults>
</compile_context>

<pallas_src>
import functools

import numpy as np
import jax
import jax.numpy as jnp
from jax.experimental import pallas as pl
from jax.experimental.pallas import tpu as pltpu


NCLS_PAD = 128   # classifier logits padded to a full lane width; sliced back to 10 outside


# ----------------------------------------------------------------------------
# In-kernel helpers
# ----------------------------------------------------------------------------

def _ada_res_norm(y, pdn, pup, nrm, T, eps):
    """AdaResNorm (reconstructed): per-frequency stats over (channel, time), residual mix.

    y   : (C, S) f32, S = F*T flat
    pdn : (S, F) one-hot (per-frequency sum),  pup : (F, S) one-hot (broadcast back)
    nrm : (C, 3) = [lambda, gamma, beta]
    """
    C = y.shape[0]
    n = float(C) * float(T)
    stats = jnp.concatenate([jnp.sum(y, axis=0, keepdims=True),
                             jnp.sum(y * y, axis=0, keepdims=True)], axis=0)      # (2, S)
    stats_f = jnp.dot(stats, pdn, preferred_element_type=jnp.float32) * (1.0 / n)  # (2, F)
    mu_f = stats_f[0:1, :]
    var_f = jnp.maximum(stats_f[1:2, :] - mu_f * mu_f, 0.0)                        # biased
    inv_f = jax.lax.rsqrt(var_f + eps)
    bc = jnp.dot(jnp.concatenate([mu_f, inv_f], axis=0), pup,
                 preferred_element_type=jnp.float32)                               # (2, S)
    xn = (y - bc[0:1, :]) * bc[1:2, :]
    lam = nrm[:, 0:1]
    return nrm[:, 1:2] * (lam * y + (1.0 - lam) * xn) + nrm[:, 2:3]


# ----------------------------------------------------------------------------
# Pallas kernels
# ----------------------------------------------------------------------------

def _stem_kernel(*refs, T, fuse_norm, eps):
    """Conv2d(1, C0, 5, stride=2, pad=2, bias=False) as a 25-tap matmul (+ AdaResNorm)."""
    it = iter(refs)
    p_ref = next(it)                      # (1, 25, S) bf16 im2col patches
    w_ref = next(it)                      # (C0, 25)   bf16 conv taps
    if fuse_norm:
        pdn_ref = next(it); pup_ref = next(it); nrm_ref = next(it)
    o_ref = next(it)                      # (1, C0, S) bf16

    y = jnp.dot(w_ref[...], p_ref[0], preferred_element_type=jnp.float32)  # (C0, S)
    if fuse_norm:
        y = _ada_res_norm(y, pdn_ref[...], pup_ref[...], nrm_ref[...], T, eps)
    o_ref[0] = y.astype(o_ref.dtype)


def stem_conv(patches, w, nrm, pdn, pup, T, fuse_norm, eps=1e-5):
    B, _, S = patches.shape
    C0 = w.shape[0]
    Fdim = pdn.shape[1]
    in_specs = [
        pl.BlockSpec((1, 25, S), lambda b: (b, 0, 0)),
        pl.BlockSpec((C0, 25), lambda b: (0, 0)),
    ]
    args = [patches, w]
    if fuse_norm:
        in_specs += [pl.BlockSpec((S, Fdim), lambda b: (0, 0)),
                     pl.BlockSpec((Fdim, S), lambda b: (0, 0)),
                     pl.BlockSpec((C0, 3), lambda b: (0, 0))]
        args += [pdn, pup, nrm]
    return pl.pallas_call(
        functools.partial(_stem_kernel, T=T, fuse_norm=fuse_norm, eps=eps),
        out_shape=jax.ShapeDtypeStruct((B, C0, S), jnp.bfloat16),
        grid=(B,),
        in_specs=in_specs,
        out_specs=pl.BlockSpec((1, C0, S), lambda b: (b, 0, 0)),
        compiler_params=pltpu.CompilerParams(dimension_semantics=("parallel",)),
    )(*args)


def _block_kernel(*refs, hi, T, fuse_norm, final_pool, eps):
    """One fused TimeFreqSepConvs block (+ optional AdaResNorm, + optional pooled classifier).

    x      : (1, Cin, S) bf16, S = F*T flat (lane dim = spatial)
    f_dw/t_dw : (hi, 5) = [tap-1, tap0, tap+1, bn_scale, bn_shift] per channel (f32)
    w_pw   : (Cout, Cin) bf16 fused pointwise weights (pw-BN scale, concat of the two
             paths and the channel shuffle pre-folded), pw_bias: (Cout, 1)
    mask   : (2, S) time-boundary masks
    pdn/pup/nrm : per-frequency norm helpers (only when fuse_norm)
    w_cls/b_cls : (NCLS_PAD, Cout)/(NCLS_PAD, 1) fused classifier (only when final_pool)
    out    : (1, Cout, S) bf16   or (1, NCLS_PAD, 1) f32 logits when final_pool
    """
    it = iter(refs)
    x_ref = next(it); fdw_ref = next(it); tdw_ref = next(it)
    w_ref = next(it); pwb_ref = next(it); mask_ref = next(it)
    if fuse_norm:
        pdn_ref = next(it); pup_ref = next(it); nrm_ref = next(it)
    if final_pool:
        wcls_ref = next(it); bcls_ref = next(it)
    o_ref = next(it)

    x = x_ref[0].astype(jnp.float32)                    # (Cin, S)
    S = x.shape[1]
    xf = x[:hi, :]                                      # frequency half
    xt = x[hi:, :]                                      # time half
    fdw = fdw_ref[...]
    tdw = tdw_ref[...]

    def shift_r(v, k):                                  # v[:, s-k], zero fill at the start
        return jnp.concatenate(
            [jnp.zeros((v.shape[0], k), v.dtype), v[:, :S - k]], axis=1)

    def shift_l(v, k):                                  # v[:, s+k], zero fill at the end
        return jnp.concatenate(
            [v[:, k:], jnp.zeros((v.shape[0], k), v.dtype)], axis=1)

    # (3,1) depthwise conv along frequency + folded BN + ReLU: shifting by +-T in the flat
    # layout hits the previous/next frequency row; boundary rows see zeros (halo in-kernel).
    af = (fdw[:, 0:1] * shift_r(xf, T)
          + fdw[:, 1:2] * xf
          + fdw[:, 2:3] * shift_l(xf, T))
    af = jnp.maximum(af * fdw[:, 3:4] + fdw[:, 4:5], 0.0)

    # (1,3) depthwise conv along time + folded BN + ReLU: shift by +-1; the wrap across
    # frequency rows is zeroed with precomputed boundary masks.
    ml = mask_ref[0:1, :]                               # 0 where t == 0
    mr = mask_ref[1:2, :]                               # 0 where t == T-1
    at = (tdw[:, 0:1] * (shift_r(xt, 1) * ml)
          + tdw[:, 1:2] * xt
          + tdw[:, 2:3] * (shift_l(xt, 1) * mr))
    at = jnp.maximum(at * tdw[:, 3:4] + tdw[:, 4:5], 0.0)

    # Single fused pointwise matmul on the MXU: (Cout, Cin) @ (Cin, S), lane-dense in S.
    a = jnp.concatenate([af, at], axis=0).astype(jnp.bfloat16)          # (Cin, S)
    y = jnp.dot(w_ref[...], a, preferred_element_type=jnp.float32)
    y = jnp.maximum(y + pwb_ref[...], 0.0)                              # (Cout, S)

    if fuse_norm:
        y = _ada_res_norm(y, pdn_ref[...], pup_ref[...], nrm_ref[...], T, eps)

    # Dropout2d: identity at inference.
    if final_pool:
        # Global spatial mean commutes with the 1x1 classifier conv -> fuse the head here.
        colsum = jnp.sum(y, axis=1, keepdims=True)                       # (Cout, 1)
        logits = (jnp.dot(wcls_ref[...], colsum,
                          preferred_element_type=jnp.float32) * (1.0 / S)
                  + bcls_ref[...])                                       # (NCLS_PAD, 1)
        o_ref[0] = logits
    else:
        o_ref[0] = y.astype(o_ref.dtype)


def tf_sep_block(x, p, mask, pdn, pup, F, T, eps=1e-5):
    B, Cin, S = x.shape
    hi = Cin // 2
    Cout = p['w_pw'].shape[0]
    fuse_norm = p['fuse_norm']
    final_pool = p['final_pool']

    in_specs = [
        pl.BlockSpec((1, Cin, S), lambda b: (b, 0, 0)),
        pl.BlockSpec((hi, 5), lambda b: (0, 0)),
        pl.BlockSpec((hi, 5), lambda b: (0, 0)),
        pl.BlockSpec((Cout, Cin), lambda b: (0, 0)),
        pl.BlockSpec((Cout, 1), lambda b: (0, 0)),
        pl.BlockSpec((2, S), lambda b: (0, 0)),
    ]
    args = [x, p['f_dw'], p['t_dw'], p['w_pw'], p['pw_bias'], mask]
    if fuse_norm:
        in_specs += [pl.BlockSpec((S, F), lambda b: (0, 0)),
                     pl.BlockSpec((F, S), lambda b: (0, 0)),
                     pl.BlockSpec((Cout, 3), lambda b: (0, 0))]
        args += [pdn, pup, p['norm']]
    if final_pool:
        in_specs += [pl.BlockSpec((NCLS_PAD, Cout), lambda b: (0, 0)),
                     pl.BlockSpec((NCLS_PAD, 1), lambda b: (0, 0))]
        args += [p['w_cls'], p['b_cls']]
        out_shape = jax.ShapeDtypeStruct((B, NCLS_PAD, 1), jnp.float32)
        out_spec = pl.BlockSpec((1, NCLS_PAD, 1), lambda b: (b, 0, 0))
    else:
        out_shape = jax.ShapeDtypeStruct((B, Cout, S), jnp.bfloat16)
        out_spec = pl.BlockSpec((1, Cout, S), lambda b: (b, 0, 0))

    return pl.pallas_call(
        functools.partial(_block_kernel, hi=hi, T=T,
                          fuse_norm=fuse_norm, final_pool=final_pool, eps=eps),
        out_shape=out_shape,
        grid=(B,),
        in_specs=in_specs,
        out_specs=out_spec,
        compiler_params=pltpu.CompilerParams(dimension_semantics=("parallel",)),
    )(*args)


# ----------------------------------------------------------------------------
# JAX glue (cheap layout plumbing only)
# ----------------------------------------------------------------------------

def maxpool2_flat(x, F, T):
    # nn.MaxPool2d(2, 2) -- tiny window reduction kept as XLA glue (2 occurrences total).
    B, C, S = x.shape
    x4 = x.reshape(B, C, F, T).reshape(B, C, F // 2, 2, T // 2, 2)
    return jnp.max(x4, axis=(3, 5)).reshape(B, C, (F // 2) * (T // 2))


def stage_constants(F, T):
    """Per-stage constants: time-boundary masks and per-frequency one-hot pooling matrices."""
    S = F * T
    t_idx = np.arange(S) % T
    f_idx = np.arange(S) // T
    mask = np.ones((2, S), np.float32)
    mask[0, t_idx == 0] = 0.0
    mask[1, t_idx == T - 1] = 0.0
    pdn = (f_idx[:, None] == np.arange(F)[None, :]).astype(np.float32)   # (S, F)
    pup = pdn.T.copy()                                                    # (F, S)
    return jnp.asarray(mask), jnp.asarray(pdn), jnp.asarray(pup)


# ----------------------------------------------------------------------------
# Parameter construction (mirrors TfSepNet.__init__ / make_layers, inference folding)
# ----------------------------------------------------------------------------

DEFAULT_CFG = ['CONV', 'N', 1, 1, 'N', 'M', 1.5, 1.5, 'N', 'M', 2, 2, 'N', 2.5, 2.5, 2.5, 'N']


def _bn_fold(c, eps=1e-5):
    # default (untrained) BatchNorm: gamma=1, beta=0, mean=0, var=1 -> affine fold.
    gamma = np.ones((c,), np.float32)
    beta = np.zeros((c,), np.float32)
    mean = np.zeros((c,), np.float32)
    var = np.ones((c,), np.float32)
    scale = gamma / np.sqrt(var + eps)
    shift = beta - mean * scale
    return scale.astype(np.float32), shift.astype(np.float32)


def _shuffle_perm(c, groups, shuffle):
    if not shuffle:
        return np.arange(c)
    assert c % groups == 0
    return np.arange(c).reshape(groups, c // groups).T.reshape(-1)


def _norm_params(c):
    lam = np.full((c, 1), 0.5, np.float32)
    gam = np.ones((c, 1), np.float32)
    bet = np.zeros((c, 1), np.float32)
    return jnp.asarray(np.concatenate([lam, gam, bet], axis=1))


def make_block_params(key, cin, cout, shuffle, groups):
    hi, ho = cin // 2, cout // 2
    ks = jax.random.split(key, 4)
    f_taps = np.asarray(jax.random.normal(ks[0], (hi, 3), jnp.float32)) * (2.0 / 3.0) ** 0.5
    t_taps = np.asarray(jax.random.normal(ks[1], (hi, 3), jnp.float32)) * (2.0 / 3.0) ** 0.5
    wf = np.asarray(jax.random.normal(ks[2], (ho, hi), jnp.float32)) * (2.0 / ho) ** 0.5
    wt = np.asarray(jax.random.normal(ks[3], (ho, hi), jnp.float32)) * (2.0 / ho) ** 0.5
    # separate folded BatchNorms for each path (freq/temp x dw/pw)
    s_fdw, b_fdw = _bn_fold(hi)
    s_tdw, b_tdw = _bn_fold(hi)
    s_fpw, b_fpw = _bn_fold(ho)
    s_tpw, b_tpw = _bn_fold(ho)
    f_dw = np.concatenate([f_taps, s_fdw[:, None], b_fdw[:, None]], axis=1).astype(np.float32)
    t_dw = np.concatenate([t_taps, s_tdw[:, None], b_tdw[:, None]], axis=1).astype(np.float32)
    # fold pw-BN scale into the weights, then bake concat + channel shuffle as a row scatter
    # into a single (Cout, Cin) pointwise matrix (free at runtime).
    wf_fold = s_fpw[:, None] * wf
    wt_fold = s_tpw[:, None] * wt
    perm = _shuffle_perm(cout, groups, shuffle)     # shuffled channel j <- concat[perm[j]]
    w = np.zeros((cout, cin), np.float32)
    bias = np.zeros((cout, 1), np.float32)
    for j in range(cout):
        src = int(perm[j])
        if src < ho:
            w[j, :hi] = wf_fold[src]
            bias[j, 0] = b_fpw[src]
        else:
            w[j, hi:] = wt_fold[src - ho]
            bias[j, 0] = b_tpw[src - ho]
    return {
        'f_dw': jnp.asarray(f_dw),
        't_dw': jnp.asarray(t_dw),
        'w_pw': jnp.asarray(w, jnp.bfloat16),
        'pw_bias': jnp.asarray(bias),
    }


def make_params(key, width, shuffle=True, shuffle_groups=10):
    keys = iter(jax.random.split(key, 64))
    plan = []
    vt = 2
    c_cur = None
    for v in DEFAULT_CFG:
        if v == 'CONV':
            c0 = 2 * width
            w = (np.asarray(jax.random.normal(next(keys), (c0, 25), jnp.float32))
                 * (2.0 / (c0 * 25)) ** 0.5)
            plan.append({'kind': 'stem', 'w': jnp.asarray(w, jnp.bfloat16),
                         'norm': _norm_params(c0), 'fuse_norm': False})
            c_cur = c0
        elif v == 'N':
            assert plan[-1]['kind'] in ('stem', 'block')
            plan[-1]['fuse_norm'] = True    # cfg always places 'N' right after CONV / a block
        elif v == 'M':
            plan.append({'kind': 'pool'})
        else:
            cin, cout = round(vt * width), round(v * width)
            p = make_block_params(next(keys), cin, cout, shuffle, shuffle_groups)
            p.update({'kind': 'block', 'fuse_norm': False, 'final_pool': False,
                      'norm': _norm_params(cout)})
            plan.append(p)
            vt = v
            c_cur = cout
    # the classifier consumes a globally pooled vector; fuse it into the last block
    last_block = None
    for item in reversed(plan):
        if item['kind'] == 'block':
            item['final_pool'] = True
            last_block = item
            break
    c_last = c_cur
    wcls = np.asarray(jax.random.normal(next(keys), (10, c_last), jnp.float32)) \
        * (1.0 / c_last) ** 0.5
    bcls = np.asarray(jax.random.normal(next(keys), (10,), jnp.float32)) * 0.01
    w_pad = np.zeros((NCLS_PAD, c_last), np.float32)
    w_pad[:10] = wcls
    b_pad = np.zeros((NCLS_PAD, 1), np.float32)
    b_pad[:10, 0] = bcls
    last_block['w_cls'] = jnp.asarray(w_pad)
    last_block['b_cls'] = jnp.asarray(b_pad)
    return plan


# ----------------------------------------------------------------------------
# Full forward pass (inference semantics)
# ----------------------------------------------------------------------------

def tfsepnet_forward(x_nchw, plan, eps=1e-5):
    # freq_mixstyle is training-only (Beta sampling + randperm) -> identity at inference.
    B, cin, H, W = x_nchw.shape
    assert cin == 1 and H % 2 == 0 and W % 2 == 0
    # 25-tap im2col of the (padded, stride-2) single-channel input -- cheap layout glue so
    # the stem becomes a single MXU matmul in-kernel.
    xp = jnp.pad(x_nchw[:, 0], ((0, 0), (2, 2), (2, 2)))
    Fc, Tc = H // 2, W // 2
    cols = []
    for i in range(5):
        for j in range(5):
            cols.append(xp[:, i:i + H:2, j:j + W:2])            # (B, Fc, Tc)
    patches = jnp.stack(cols, axis=1).reshape(B, 25, Fc * Tc).astype(jnp.bfloat16)

    const_cache = {}

    def consts(F, T):
        if (F, T) not in const_cache:
            const_cache[(F, T)] = stage_constants(F, T)
        return const_cache[(F, T)]

    stem = plan[0]
    mask, pdn, pup = consts(Fc, Tc)
    h = stem_conv(patches, stem['w'], stem['norm'], pdn, pup, Tc, stem['fuse_norm'], eps)

    logits = None
    for item in plan[1:]:
        if item['kind'] == 'pool':
            h = maxpool2_flat(h, Fc, Tc)
            Fc, Tc = Fc // 2, Tc // 2
        else:
            mask, pdn, pup = consts(Fc, Tc)
            out = tf_sep_block(h, item, mask, pdn, pup, Fc, Tc, eps)
            if item['final_pool']:
                logits = out.reshape(B, NCLS_PAD)[:, :10]   # classifier fused in-kernel
            else:
                h = out
    return logits


if __name__ == "__main__":
    key = jax.random.PRNGKey(0)
    k_x, k_p = jax.random.split(key)

    width = 20            # keeps every channel count even and divisible by shuffle_groups=10
    B, H, W = 2, 16, 16   # input log-mel spectrogram (B, 1, F, T), NCHW like the PyTorch module

    x = jax.random.normal(k_x, (B, 1, H, W), jnp.float32)
    plan = make_params(k_p, width, shuffle=True, shuffle_groups=10)

    y = tfsepnet_forward(x, plan)
    y = jax.block_until_ready(y)
    assert y.shape == (B, 10) and bool(jnp.all(jnp.isfinite(y)))
    print("KERNEL_OK")
</pallas_src>

<mosaic_0001>
module attributes {stable_mosaic.version = 11 : i64} {
  func.func @_stem_kernel(%arg0: i32, %arg1: memref<1x25x64xbf16, #tpu.memory_space<vmem>>, %arg2: memref<40x25xbf16, #tpu.memory_space<vmem>>, %arg3: memref<64x8xf32, #tpu.memory_space<vmem>>, %arg4: memref<8x64xf32, #tpu.memory_space<vmem>>, %arg5: memref<40x3xf32, #tpu.memory_space<vmem>>, %arg6: memref<1x40x64xbf16, #tpu.memory_space<vmem>>) attributes {dimension_semantics = [#tpu.dimension_semantics<parallel>], iteration_bounds = array<i64: 2>, scalar_prefetch = 0 : i64, scratch_operands = 0 : i64, tpu.core_type = #tpu.core_type<tc>, window_params = [{transform_indices = @transform_0, window_bounds = array<i64: 1, 25, 64>}, {pipeline_mode = #tpu.pipeline_mode<synchronous>, transform_indices = @transform_1, window_bounds = array<i64: 40, 25>}, {pipeline_mode = #tpu.pipeline_mode<synchronous>, transform_indices = @transform_2, window_bounds = array<i64: 64, 8>}, {pipeline_mode = #tpu.pipeline_mode<synchronous>, transform_indices = @transform_3, window_bounds = array<i64: 8, 64>}, {pipeline_mode = #tpu.pipeline_mode<synchronous>, transform_indices = @transform_4, window_bounds = array<i64: 40, 3>}, {transform_indices = @transform_5, window_bounds = array<i64: 1, 40, 64>}]} {
    %c0 = arith.constant 0 : index
    %c0_0 = arith.constant 0 : index
    %0 = vector.load %arg2[%c0, %c0_0] : memref<40x25xbf16, #tpu.memory_space<vmem>>, vector<40x25xbf16>
    %c0_1 = arith.constant 0 : index
    %c0_2 = arith.constant 0 : index
    %c0_3 = arith.constant 0 : index
    %1 = vector.load %arg1[%c0_1, %c0_2, %c0_3] : memref<1x25x64xbf16, #tpu.memory_space<vmem>>, vector<1x25x64xbf16>
    %2 = vector.shape_cast %1 : vector<1x25x64xbf16> to vector<25x64xbf16>
    %cst = arith.constant dense<0.000000e+00> : vector<40x64xf32>
    %3 = tpu.matmul %0, %2, %cst {dimension_numbers = #tpu.dot_dimension_numbers<[1], [0], [0], [1], [0, 0, 1, 1], [], []>} : vector<40x25xbf16>, vector<25x64xbf16>, vector<40x64xf32> -> vector<40x64xf32>
    %c0_4 = arith.constant 0 : index
    %c0_5 = arith.constant 0 : index
    %4 = vector.load %arg3[%c0_4, %c0_5] : memref<64x8xf32, #tpu.memory_space<vmem>>, vector<64x8xf32>
    %c0_6 = arith.constant 0 : index
    %c0_7 = arith.constant 0 : index
    %5 = vector.load %arg4[%c0_6, %c0_7] : memref<8x64xf32, #tpu.memory_space<vmem>>, vector<8x64xf32>
    %c0_8 = arith.constant 0 : index
    %c0_9 = arith.constant 0 : index
    %6 = vector.load %arg5[%c0_8, %c0_9] : memref<40x3xf32, #tpu.memory_space<vmem>>, vector<40x3xf32>
    %cst_10 = arith.constant dense<0.000000e+00> : vector<64xf32>
    %7 = vector.multi_reduction <add>, %3, %cst_10 [0] : vector<40x64xf32> to vector<64xf32>
    %8 = vector.shape_cast %7 : vector<64xf32> to vector<1x64xf32>
    %9 = arith.mulf %3, %3 : vector<40x64xf32>
    %cst_11 = arith.constant dense<0.000000e+00> : vector<64xf32>
    %10 = vector.multi_reduction <add>, %9, %cst_11 [0] : vector<40x64xf32> to vector<64xf32>
    %11 = vector.shape_cast %10 : vector<64xf32> to vector<1x64xf32>
    %12 = tpu.concatenate %8, %11 in 0 : vector<1x64xf32>, vector<1x64xf32> -> vector<2x64xf32>
    %cst_12 = arith.constant dense<0.000000e+00> : vector<2x8xf32>
    %13 = tpu.matmul %12, %4, %cst_12 {dimension_numbers = #tpu.dot_dimension_numbers<[1], [0], [0], [1], [0, 0, 1, 1], [], []>} : vector<2x64xf32>, vector<64x8xf32>, vector<2x8xf32> -> vector<2x8xf32>
    %cst_13 = arith.constant 3.125000e-03 : f32
    %14 = vector.broadcast %cst_13 : f32 to vector<2x8xf32>
    %15 = arith.mulf %13, %14 : vector<2x8xf32>
    %16 = vector.extract_strided_slice %15 {offsets = [0, 0], sizes = [1, 8], strides = [1, 1]} : vector<2x8xf32> to vector<1x8xf32>
    %17 = vector.extract_strided_slice %15 {offsets = [1, 0], sizes = [1, 8], strides = [1, 1]} : vector<2x8xf32> to vector<1x8xf32>
    %18 = arith.mulf %16, %16 : vector<1x8xf32>
    %19 = arith.subf %17, %18 : vector<1x8xf32>
    %cst_14 = arith.constant 0.000000e+00 : f32
    %20 = vector.broadcast %cst_14 : f32 to vector<1x8xf32>
    %21 = arith.maximumf %19, %20 : vector<1x8xf32>
    %cst_15 = arith.constant 9.99999974E-6 : f32
    %22 = vector.broadcast %cst_15 : f32 to vector<1x8xf32>
    %23 = arith.addf %21, %22 : vector<1x8xf32>
    %24 = math.rsqrt %23 : vector<1x8xf32>
    %25 = tpu.concatenate %16, %24 in 0 : vector<1x8xf32>, vector<1x8xf32> -> vector<2x8xf32>
    %cst_16 = arith.constant dense<0.000000e+00> : vector<2x64xf32>
    %26 = tpu.matmul %25, %5, %cst_16 {dimension_numbers = #tpu.dot_dimension_numbers<[1], [0], [0], [1], [0, 0, 1, 1], [], []>} : vector<2x8xf32>, vector<8x64xf32>, vector<2x64xf32> -> vector<2x64xf32>
    %27 = vector.extract_strided_slice %26 {offsets = [0, 0], sizes = [1, 64], strides = [1, 1]} : vector<2x64xf32> to vector<1x64xf32>
    %28 = vector.broadcast %27 : vector<1x64xf32> to vector<40x64xf32>
    %29 = arith.subf %3, %28 : vector<40x64xf32>
    %30 = vector.extract_strided_slice %26 {offsets = [1, 0], sizes = [1, 64], strides = [1, 1]} : vector<2x64xf32> to vector<1x64xf32>
    %31 = vector.broadcast %30 : vector<1x64xf32> to vector<40x64xf32>
    %32 = arith.mulf %29, %31 : vector<40x64xf32>
    %33 = vector.extract_strided_slice %6 {offsets = [0, 0], sizes = [40, 1], strides = [1, 1]} : vector<40x3xf32> to vector<40x1xf32>
    %34 = vector.extract_strided_slice %6 {offsets = [0, 1], sizes = [40, 1], strides = [1, 1]} : vector<40x3xf32> to vector<40x1xf32>
    %35 = vector.broadcast %33 : vector<40x1xf32> to vector<40x64xf32>
    %36 = arith.mulf %35, %3 : vector<40x64xf32>
    %cst_17 = arith.constant 1.000000e+00 : f32
    %37 = vector.broadcast %cst_17 : f32 to vector<40x1xf32>
    %38 = arith.subf %37, %33 : vector<40x1xf32>
    %39 = vector.broadcast %38 : vector<40x1xf32> to vector<40x64xf32>
    %40 = arith.mulf %39, %32 : vector<40x64xf32>
    %41 = arith.addf %36, %40 : vector<40x64xf32>
    %42 = vector.broadcast %34 : vector<40x1xf32> to vector<40x64xf32>
    %43 = arith.mulf %42, %41 : vector<40x64xf32>
    %44 = vector.extract_strided_slice %6 {offsets = [0, 2], sizes = [40, 1], strides = [1, 1]} : vector<40x3xf32> to vector<40x1xf32>
    %45 = vector.broadcast %44 : vector<40x1xf32> to vector<40x64xf32>
    %46 = arith.addf %43, %45 : vector<40x64xf32>
    %47 = arith.truncf %46 : vector<40x64xf32> to vector<40x64xbf16>
    %c0_18 = arith.constant 0 : index
    %c0_19 = arith.constant 0 : index
    %c0_20 = arith.constant 0 : index
    %48 = vector.load %arg6[%c0_18, %c0_19, %c0_20] : memref<1x40x64xbf16, #tpu.memory_space<vmem>>, vector<1x40x64xbf16>
    %49 = vector.shape_cast %48 : vector<1x40x64xbf16> to vector<40x64xbf16>
    %50 = vector.shape_cast %47 : vector<40x64xbf16> to vector<1x40x64xbf16>
    tpu.vector_store %arg6[%c0_18, %c0_19, %c0_20], %50 {strides = array<i32>} : memref<1x40x64xbf16, #tpu.memory_space<vmem>>, vector<1x40x64xbf16>,
    return
  }
  func.func @transform_0(%arg0: i32) -> (i32, i32, i32) {
    %c0_i32 = arith.constant 0 : i32
    %c0_i32_0 = arith.constant 0 : i32
    %c0_i32_1 = arith.constant 0 : i32
    return %arg0, %c0_i32, %c0_i32_0 : i32, i32, i32
  }
  func.func @transform_1(%arg0: i32) -> (i32, i32) {
    %c0_i32 = arith.constant 0 : i32
    %c0_i32_0 = arith.constant 0 : i32
    %c0_i32_1 = arith.constant 0 : i32
    return %c0_i32, %c0_i32_0 : i32, i32
  }
  func.func @transform_2(%arg0: i32) -> (i32, i32) {
    %c0_i32 = arith.constant 0 : i32
    %c0_i32_0 = arith.constant 0 : i32
    %c0_i32_1 = arith.constant 0 : i32
    return %c0_i32, %c0_i32_0 : i32, i32
  }
  func.func @transform_3(%arg0: i32) -> (i32, i32) {
    %c0_i32 = arith.constant 0 : i32
    %c0_i32_0 = arith.constant 0 : i32
    %c0_i32_1 = arith.constant 0 : i32
    return %c0_i32, %c0_i32_0 : i32, i32
  }
  func.func @transform_4(%arg0: i32) -> (i32, i32) {
    %c0_i32 = arith.constant 0 : i32
    %c0_i32_0 = arith.constant 0 : i32
    %c0_i32_1 = arith.constant 0 : i32
    return %c0_i32, %c0_i32_0 : i32, i32
  }
  func.func @transform_5(%arg0: i32) -> (i32, i32, i32) {
    %c0_i32 = arith.constant 0 : i32
    %c0_i32_0 = arith.constant 0 : i32
    %c0_i32_1 = arith.constant 0 : i32
    return %arg0, %c0_i32, %c0_i32_0 : i32, i32, i32
  }
}

</mosaic_0001>

<llo_original>
// kernel: tpu_custom_call.1
$region0: #{tpu_custom_call.1}
  #allocation0 [shape = 'u32[]', space=smem, size = 0x4, offset = 0x4, fixed_abs, tag = 'smem constant byte address 0x4 - core index']
  #allocation1 [shape = 'u32[72,128]{1,0:T(1,128)}', space=vmem, size = 0x9000, scoped, tag = 'internal scratch']
  %s0 = inlined_call_operand.vmem [shape: bf16[2,25,64], index: 0, kind: input, shape index: {}]
  %s1 = inlined_call_operand.vmem [shape: bf16[40,25], index: 1, kind: input, shape index: {}]
  %s2 = inlined_call_operand.vmem [shape: f32[64,8], index: 2, kind: input, shape index: {}]
  %s3 = inlined_call_operand.vmem [shape: f32[8,64], index: 3, kind: input, shape index: {}]
  %s4 = inlined_call_operand.vmem [shape: f32[40,3], index: 4, kind: input, shape index: {}]
  %s5 = inlined_call_operand.hbm [shape: bf16[2,40,64], index: 5, kind: output, shape index: {}]
  %s6 = sld [smem:[#allocation0]]
  $region53: #{tpu_custom_call.1} parent=0
    _
  %s8 = ssub.s32 1, %s6
  %s9 = scalar_select 0, %s8, %s6
  $region1: #{tpu_custom_call.1} parent=0
    #allocation2 [shape = 'u8[20480]{0}', space=vmem, size = 0x5000, scoped, tag = 'output window, operand 0']
    #allocation3 [shape = 's32[2]{0}', space=sflag, size = 0x8, scoped, tag = 'scoped memory for tpu_custom_call.1']
    %10 = vsyncpa [#allocation3], 0
    %s11 = scalar_lea.sflag [#allocation3], 1
    %12 = vsyncpa %s11, 0
    loop: start=0, step=1, limit=4
    $region2: #{tpu_custom_call.1} parent=1 // loop_pre_header
      _
    $region3: #{tpu_custom_call.1} parent=1 // loop_header
      %s14 = sphi 0, %s18
      %p15 = scmp.ge.s32.totalorder %s14, 4
      %s24 = sphi 0, %s26
      %s27 = sphi 0, %s24
      %s28 = sphi 0, %s27
      %s44 = sphi 0, %s28
      %s48 = sphi 0, %s48
      %s50 = sphi 0, %s48
      %s51 = sphi 0, %s50
      %s65 = sphi 0, %s51
      %s69 = sphi 0, %s69
      %s71 = sphi 0, %s69
      %s72 = sphi 0, %s71
      %s86 = sphi 0, %s72
      %s90 = sphi 0, %s90
      %s92 = sphi 0, %s90
      %s93 = sphi 0, %s92
      %s107 = sphi 0, %s93
      %s111 = sphi 0, %s111
      %s113 = sphi 0, %s111
      %s114 = sphi 0, %s113
      %s128 = sphi 0, %s114
      %s134 = sphi 0, %s136
      %s137 = sphi 0, %s134
      %s138 = sphi 0, %s137
      %s154 = sphi 0, %s138
    $region4: #{tpu_custom_call.1} parent=1 // loop_header_branch
      %17 = sbr.rel (%p15) target = $region8
    $region5: #{tpu_custom_call.1} parent=1 // loop_body
      %s19 = ssub.s32 %s14, 1
      %s20 = ssub.s32 %s14, 2
      %s21 = sadd.s32 %s14, 1
      %s22 = ssub.s32 %s14, %s21
      %p23 = scmp.eq.s32.totalorder %s22, 0
      %s25 = sadd.s32 %s24, 1
      %s26 = scalar_select %p23, %s24, %s25
      %p29 = pneg %p23
      %p30 = scmp.eq.s32.totalorder %s14, 1
      %p31 = por %p29, %p30
      %p32 = scmp.ne.s32.totalorder %s24, %s27
      %p33 = scmp.eq.s32.totalorder %s14, 0
      %p34 = por %p32, %p33
      %p35 = scmp.ne.s32.totalorder %s24, %s27
      %p36 = scmp.eq.s32.totalorder %s19, 1
      %p37 = por %p35, %p36
      %p38 = scmp.ne.s32.totalorder %s27, %s28
      %p39 = scmp.eq.s32.totalorder %s19, 0
      %p40 = por %p38, %p39
      %p41 = scmp.ne.s32.totalorder %s27, %s28
      %p42 = scmp.eq.s32.totalorder %s20, 1
      %p43 = por %p41, %p42
      %p45 = scmp.ne.s32.totalorder %s28, %s44
      %p46 = scmp.eq.s32.totalorder %s20, 0
      %p47 = por %p45, %p46
      %s49 = sadd.s32 %s48, 1
      %p52 = scmp.eq.s32.totalorder %s14, 1
      %p53 = scmp.ne.s32.totalorder %s48, %s50
      %p54 = scmp.eq.s32.totalorder %s14, 0
      %p55 = por %p53, %p54
      %p56 = scmp.ne.s32.totalorder %s48, %s50
      %p57 = scmp.eq.s32.totalorder %s19, 1
      %p58 = por %p56, %p57
      %p59 = scmp.ne.s32.totalorder %s50, %s51
      %p60 = scmp.eq.s32.totalorder %s19, 0
      %p61 = por %p59, %p60
      %p62 = scmp.ne.s32.totalorder %s50, %s51
      %p63 = scmp.eq.s32.totalorder %s20, 1
      %p64 = por %p62, %p63
      %p66 = scmp.ne.s32.totalorder %s51, %s65
      %p67 = scmp.eq.s32.totalorder %s20, 0
      %p68 = por %p66, %p67
      %s70 = sadd.s32 %s69, 1
      %p73 = scmp.eq.s32.totalorder %s14, 1
      %p74 = scmp.ne.s32.totalorder %s69, %s71
      %p75 = scmp.eq.s32.totalorder %s14, 0
      %p76 = por %p74, %p75
      %p77 = scmp.ne.s32.totalorder %s69, %s71
      %p78 = scmp.eq.s32.totalorder %s19, 1
      %p79 = por %p77, %p78
      %p80 = scmp.ne.s32.totalorder %s71, %s72
      %p81 = scmp.eq.s32.totalorder %s19, 0
      %p82 = por %p80, %p81
      %p83 = scmp.ne.s32.totalorder %s71, %s72
      %p84 = scmp.eq.s32.totalorder %s20, 1
      %p85 = por %p83, %p84
      %p87 = scmp.ne.s32.totalorder %s72, %s86
      %p88 = scmp.eq.s32.totalorder %s20, 0
      %p89 = por %p87, %p88
      %s91 = sadd.s32 %s90, 1
      %p94 = scmp.eq.s32.totalorder %s14, 1
      %p95 = scmp.ne.s32.totalorder %s90, %s92
      %p96 = scmp.eq.s32.totalorder %s14, 0
      %p97 = por %p95, %p96
      %p98 = scmp.ne.s32.totalorder %s90, %s92
      %p99 = scmp.eq.s32.totalorder %s19, 1
      %p100 = por %p98, %p99
      %p101 = scmp.ne.s32.totalorder %s92, %s93
      %p102 = scmp.eq.s32.totalorder %s19, 0
      %p103 = por %p101, %p102
      %p104 = scmp.ne.s32.totalorder %s92, %s93
      %p105 = scmp.eq.s32.totalorder %s20, 1
      %p106 = por %p104, %p105
      %p108 = scmp.ne.s32.totalorder %s93, %s107
      %p109 = scmp.eq.s32.totalorder %s20, 0
      %p110 = por %p108, %p109
      %s112 = sadd.s32 %s111, 1
      %p115 = scmp.eq.s32.totalorder %s14, 1
      %p116 = scmp.ne.s32.totalorder %s111, %s113
      %p117 = scmp.eq.s32.totalorder %s14, 0
      %p118 = por %p116, %p117
      %p119 = scmp.ne.s32.totalorder %s111, %s113
      %p120 = scmp.eq.s32.totalorder %s19, 1
      %p121 = por %p119, %p120
      %p122 = scmp.ne.s32.totalorder %s113, %s114
      %p123 = scmp.eq.s32.totalorder %s19, 0
      %p124 = por %p122, %p123
      %p125 = scmp.ne.s32.totalorder %s113, %s114
      %p126 = scmp.eq.s32.totalorder %s20, 1
      %p127 = por %p125, %p126
      %p129 = scmp.ne.s32.totalorder %s114, %s128
      %p130 = scmp.eq.s32.totalorder %s20, 0
      %p131 = por %p129, %p130
      %s132 = ssub.s32 %s14, %s21
      %p133 = scmp.eq.s32.totalorder %s132, 0
      %s135 = sadd.s32 %s134, 1
      %s136 = scalar_select %p133, %s134, %s135
      %p139 = pneg %p133
      %p140 = scmp.eq.s32.totalorder %s14, 1
      %p141 = por %p139, %p140
      %p142 = scmp.ne.s32.totalorder %s134, %s137
      %p143 = scmp.eq.s32.totalorder %s14, 0
      %p144 = por %p142, %p143
      %p145 = scmp.ne.s32.totalorder %s134, %s137
      %p146 = scmp.eq.s32.totalorder %s19, 1
      %p147 = por %p145, %p146
      %p148 = scmp.ne.s32.totalorder %s137, %s138
      %p149 = scmp.eq.s32.totalorder %s19, 0
      %p150 = por %p148, %p149
      %p151 = scmp.ne.s32.totalorder %s137, %s138
      %p152 = scmp.eq.s32.totalorder %s20, 1
      %p153 = por %p151, %p152
      %p155 = scmp.ne.s32.totalorder %s138, %s154
      %p156 = scmp.eq.s32.totalorder %s20, 0
      %p157 = por %p155, %p156
      %p158 = scmp.le.s32.totalorder 1, %s14
      %p159 = scmp.lt.s32.totalorder %s14, 3
      %p160 = pnand %p158, %p159
      %p161 = pneg %p160
      // Predicated region
      $region9: #{tpu_custom_call.1} parent=5 // pred_check
        _
      $region10: #{tpu_custom_call.1} parent=5 // pred_check_branch
        %163 = sbr.rel (%p160) target = $region12
      $region11: #{tpu_custom_call.1} parent=5 // pred_region
        %s164 = ssub.s32 %s14, 1
        // Predicated region
        $region13: #{tpu_custom_call.1} parent=11 // pred_check
          %p165 = pneg %p61
        $region14: #{tpu_custom_call.1} parent=11 // pred_check_branch
          %167 = sbr.rel (%p165) target = $region16
        $region15: #{tpu_custom_call.1} parent=11 // pred_region
          _
        $region16: #{tpu_custom_call.1} parent=11 // pred_fallthru
          _
        // Predicated region
        $region17: #{tpu_custom_call.1} parent=11 // pred_check
          %p168 = pneg %p82
        $region18: #{tpu_custom_call.1} parent=11 // pred_check_branch
          %170 = sbr.rel (%p168) target = $region20
        $region19: #{tpu_custom_call.1} parent=11 // pred_region
          _
        $region20: #{tpu_custom_call.1} parent=11 // pred_fallthru
          _
        // Predicated region
        $region21: #{tpu_custom_call.1} parent=11 // pred_check
          %p171 = pneg %p103
        $region22: #{tpu_custom_call.1} parent=11 // pred_check_branch
          %173 = sbr.rel (%p171) target = $region24
        $region23: #{tpu_custom_call.1} parent=11 // pred_region
          _
        $region24: #{tpu_custom_call.1} parent=11 // pred_fallthru
          _
        // Predicated region
        $region25: #{tpu_custom_call.1} parent=11 // pred_check
          %p174 = pneg %p124
        $region26: #{tpu_custom_call.1} parent=11 // pred_check_branch
          %176 = sbr.rel (%p174) target = $region28
        $region27: #{tpu_custom_call.1} parent=11 // pred_region
          _
        $region28: #{tpu_custom_call.1} parent=11 // pred_fallthru
          _
      $region12: #{tpu_custom_call.1} parent=5 // pred_fallthru
        _
      %p177 = scmp.lt.s32.totalorder %s14, 2
      // Predicated region
      $region29: #{tpu_custom_call.1} parent=5 // pred_check
        %p178 = pneg %p177
      $region30: #{tpu_custom_call.1} parent=5 // pred_check_branch
        %180 = sbr.rel (%p178) target = $region32
      $region31: #{tpu_custom_call.1} parent=5 // pred_region
        // Predicated region
        $region33: #{tpu_custom_call.1} parent=31 // pred_check
          %p181 = pneg %p34
        $region34: #{tpu_custom_call.1} parent=31 // pred_check_branch
          %183 = sbr.rel (%p181) target = $region36
        $region35: #{tpu_custom_call.1} parent=31 // pred_region
          %p184 = scmp.lt.s32.totalorder %s14, 1
          %s185 = scalar_select %p184, %s14, 1
          %s186 = smul.addr %s185, 4
          %s187 = smul.addr %s186, 4
          %s188 = scalar_lea.vmem %s0, %s187
        $region36: #{tpu_custom_call.1} parent=31 // pred_fallthru
          _
      $region32: #{tpu_custom_call.1} parent=5 // pred_fallthru
        _
      %p189 = scmp.le.s32.totalorder 1, %s14
      %p190 = scmp.lt.s32.totalorder %s14, 3
      %p191 = pnand %p189, %p190
      %p192 = pneg %p191
      // Predicated region
      $region37: #{tpu_custom_call.1} parent=5 // pred_check
        _
      $region38: #{tpu_custom_call.1} parent=5 // pred_check_branch
        %194 = sbr.rel (%p191) target = $region40
      $region39: #{tpu_custom_call.1} parent=5 // pred_region
        %s195 = ssub.s32 %s14, 1
        %p196 = scmp.lt.s32.totalorder %s19, 1
        %s197 = scalar_select %p196, %s19, 1
        %s198 = smul.addr %s197, 4
        %s199 = smul.addr %s198, 4
        %s200 = scalar_lea.vmem %s0, %s199
        %p201 = pneg %p40
        %p202 = pneg %p37
        %p203 = pneg %p61
        %p204 = pneg %p58
        %p205 = pneg %p82
        %p206 = pneg %p79
        %p207 = pneg %p103
        %p208 = pneg %p100
        %p209 = pneg %p124
        %p210 = pneg %p121
        %p211 = pneg %p150
        %p212 = pneg %p147
        %s213 = sand.u32 %s137, 1
        %s214 = scalar_lea.sflag [#allocation3], %s213
        %s215 = sand.u32 %s137, 1
        %s216 = smul.addr %s215, 20
        %s217 = scalar_lea.vmem [#allocation2], %s216
        %p218 = scmp.lt.s32.totalorder %s19, 1
        %s219 = scalar_select %p218, %s19, 1
        %s220 = smul.addr %s219, 4
        %s221 = smul.addr %s220, 4
        %s222 = scalar_lea.vmem %s0, %s221
        %v224 = vld [vmem:[%s1] sm:$0xf]
        %v225 = vld [vmem:[%s1 + $0x4] sm:$0xf]
        %v226 = vld [vmem:[%s1 + $0x8] sm:$0xf]
        %v227 = vld [vmem:[%s1 + $0xc] sm:$0xf]
        %v228 = vld [vmem:[%s1 + $0x10] sm:$0xf]
        %v229 = vld [vmem:[%s222] sm:$0xf]
        %v230 = vld [vmem:[%s222 + $0x4] sm:$0xf]
        %v231 = vld [vmem:[%s222 + $0x8] sm:$0xf]
        %v232 = vld [vmem:[%s222 + $0xc] sm:$0x1]
        %v238 = vunpack.c.l.b16 %v224
        %v239 = vunpack.c.l.b16 %v225
        %v240 = vunpack.c.l.b16 %v226
        %v241 = vunpack.c.l.b16 %v227
        %v242 = vunpack.c.l.b16 %v228
        %v243 = vpack.c.b16 %v239, %v238
        %v244 = vpack.c.b16 %v241, %v240
        %v245 = vpack.c.b16 %v242, %v242
        %v250 = vunpack.c.l.b16 %v229
        %v251 = vunpack.c.l.b16 %v230
        %v252 = vunpack.c.l.b16 %v231
        %v253 = vunpack.c.l.b16 %v232
        %v254 = vpack.c.b16 %v251, %v250
        %v255 = vpack.c.b16 %v253, %v252
        %vm257 = vcmask 203776
        %v259 = vsel %vm257, %v243, 0
        %v262 = vsel %vm257, %v244, 0
        %v265 = vsel %vm257, %v245, 0
        %vm267 = vcmask 1043456
        %vm268 = vcmask 1044480
        %v269 = vsel %vm267, 4294967295, 65535
        %v270 = vsel %vm268, %v269, 0
        %v272 = vand.u32 %v255, %v270
        %274 = vmatpush.bf16.msra.mxu0 0
        %275 = vmatpush.bf16.msra.mxu0 0
        %276 = vmatpush.bf16.msra.mxu0 0
        %277 = vmatpush.bf16.msra.mxu0 0
        %278 = vmatpush.bf16.msra.mxu0 0
        %279 = vmatpush.bf16.msra.mxu0 0
        %280 = vmatpush.bf16.msra.mxu0 %v272
        %281 = vmatpush.bf16.msra.mxu0 %v254
        %282 = vmatmul.bf16.gmra.mxu0 %v259
        %v283 = vpop.f32.mrf.mxu0
        %v284 = vadd.f32 0.0, %v283
        %v285 = vpop.f32.mrf.mxu0
        %v286 = vadd.f32 0.0, %v285
        %287 = vmatmul.bf16.gmra.mxu0 %v262
        %v288 = vpop.f32.mrf.mxu0
        %v289 = vadd.f32 0.0, %v288
        %v290 = vpop.f32.mrf.mxu0
        %v291 = vadd.f32 0.0, %v290
        %292 = vmatmul.bf16.gmra.mxu0 %v265
        %v293 = vpop.f32.mrf.mxu0
        %v294 = vadd.f32 0.0, %v293
        %v295 = vpop.f32.mrf.mxu0
        %296 = vdwg.mxu0
        %v297 = vld [vmem:[%s2] sm:$0xff]
        %v298 = vld [vmem:[%s2 + $0x8] sm:$0xff]
        %v299 = vld [vmem:[%s2 + $0x10] sm:$0xff]
        %v300 = vld [vmem:[%s2 + $0x18] sm:$0xff]
        %v301 = vld [vmem:[%s2 + $0x20] sm:$0xff]
        %v302 = vld [vmem:[%s2 + $0x28] sm:$0xff]
        %v303 = vld [vmem:[%s2 + $0x30] sm:$0xff]
        %v304 = vld [vmem:[%s2 + $0x38] sm:$0xff]
        %v305 = vld [vmem:[%s3] sm:$0xff]
        %v306 = vld [vmem:[%s4] sm:$0xff]
        %v307 = vld [vmem:[%s4 + $0x8] sm:$0xff]
        %v308 = vld [vmem:[%s4 + $0x10] sm:$0xff]
        %v309 = vld [vmem:[%s4 + $0x18] sm:$0xff]
        %v310 = vld [vmem:[%s4 + $0x20] sm:$0xff]
        %vm311 = vcmask 523264
        %v312 = vsel %vm311, %v284, 0.0
        %v313 = vsel %vm311, %v286, 0.0
        %v314 = vadd.f32 %v312, %v313
        %v315 = vsel %vm311, %v289, 0.0
        %v316 = vadd.f32 %v314, %v315
        %v317 = vsel %vm311, %v291, 0.0
        %v318 = vadd.f32 %v316, %v317
        %v319 = vsel %vm311, %v294, 0.0
        %v320 = vadd.f32 %v318, %v319
        %v321 = vrot.slane %v320, 4
        %v322 = vadd.f32 %v320, %v321
        %v323 = vrot.slane %v322, 2
        %v324 = vadd.f32 %v322, %v323
        %v325 = vrot.slane %v324, 1
        %v326 = vadd.f32 %v324, %v325
        %v327 = vmul.f32 %v284, %v284
        %v328 = vmul.f32 %v286, %v286
        %v329 = vmul.f32 %v289, %v289
        %v330 = vmul.f32 %v291, %v291
        %v331 = vmul.f32 %v294, %v294
        %v332 = vsel %vm311, %v327, 0.0
        %v333 = vsel %vm311, %v328, 0.0
        %v334 = vadd.f32 %v332, %v333
        %v335 = vsel %vm311, %v329, 0.0
        %v336 = vadd.f32 %v334, %v335
        %v337 = vsel %vm311, %v330, 0.0
        %v338 = vadd.f32 %v336, %v337
        %v339 = vsel %vm311, %v331, 0.0
        %v340 = vadd.f32 %v338, %v339
        %v341 = vrot.slane %v340, 4
        %v342 = vadd.f32 %v340, %v341
        %v343 = vrot.slane %v342, 2
        %v344 = vadd.f32 %v342, %v343
        %v345 = vrot.slane %v344, 1
        %v346 = vadd.f32 %v344, %v345
        %vm347 = vcmask 1040384
        %v348 = vsel %vm347, %v326, %v346
        %v350 = vsel %vm311, %v348, 0
        %352 = vmatpush.msra.mxu0 0.0
        %353 = vmatpush.msra.mxu0 0.0
        %354 = vmatpush.msra.mxu0 0.0
        %355 = vmatpush.msra.mxu0 0.0
        %356 = vmatpush.msra.mxu0 0.0
        %357 = vmatpush.msra.mxu0 0.0
        %358 = vmatpush.msra.mxu0 0.0
        %359 = vmatpush.msra.mxu0 0.0
        %360 = vmatpush.msra.mxu0 %v304
        %361 = vmatpush.msra.mxu0 %v303
        %362 = vmatpush.msra.mxu0 %v302
        %363 = vmatpush.msra.mxu0 %v301
        %364 = vmatpush.msra.mxu0 %v300
        %365 = vmatpush.msra.mxu0 %v299
        %366 = vmatpush.msra.mxu0 %v298
        %367 = vmatpush.msra.mxu0 %v297
        %368 = vmatmul.f32.gmra.mxu0 %v350
        %v369 = vpop.f32.mrf.mxu0
        %v370 = vadd.f32 0.0, %v369
        %371 = vdwg.mxu0
        %v372 = vmul.f32 %v370, 0.003125
        %v373 = vmul.f32 %v372, %v372
        %v375 = vrot.slane %v373, 7
        %v377 = vsub.f32 %v372, %v375
        %v378 = vmax.f32 %v377, 0.0
        %v379 = vadd.f32 %v378, 1e-05
        %v380 = vrsqrt.pop %v379
        %v381 = vmul.f32 %v380, %v379
        %v382 = vmul.f32 %v381, %v380
        %v383 = vmul.f32 0.5, %v382
        %v384 = vsub.f32 1.5, %v383
        %v385 = vmul.f32 %v380, %v384
        %vm386 = vweird.f32 %v379
        %vm387 = vweird.f32 %v380
        %vm388 = vmor %vm386, %vm387
        %v389 = vsel %vm388, %v380, %v385
        %v390 = vsel %vm347, %v372, %v389
        %vm391 = vcmask 64512
        %v393 = vsel %vm391, %v390, 0
        %395 = vmatpush.msra.mxu0 0.0
        %396 = vmatpush.msra.mxu0 0.0
        %397 = vmatpush.msra.mxu0 0.0
        %398 = vmatpush.msra.mxu0 0.0
        %399 = vmatpush.msra.mxu0 0.0
        %400 = vmatpush.msra.mxu0 0.0
        %401 = vmatpush.msra.mxu0 0.0
        %402 = vmatpush.msra.mxu0 0.0
        %403 = vmatpush.msra.mxu0 0.0
        %404 = vmatpush.msra.mxu0 0.0
        %405 = vmatpush.msra.mxu0 0.0
        %406 = vmatpush.msra.mxu0 0.0
        %407 = vmatpush.msra.mxu0 0.0
        %408 = vmatpush.msra.mxu0 0.0
        %409 = vmatpush.msra.mxu0 0.0
        %410 = vmatpush.msra.mxu0 %v305
        %411 = vmatmul.f32.gmra.mxu0 %v393
        %v412 = vpop.f32.mrf.mxu0
        %v413 = vadd.f32 0.0, %v412
        %414 = vdwg.mxu0
        %v415 = vperm.slane %v413, 0
        %v416 = vsub.f32 %v284, %v415
        %v417 = vsub.f32 %v286, %v415
        %v418 = vsub.f32 %v289, %v415
        %v419 = vsub.f32 %v291, %v415
        %v420 = vsub.f32 %v294, %v415
        %v421 = vperm.slane %v413, 1
        %v422 = vmul.f32 %v416, %v421
        %v423 = vmul.f32 %v417, %v421
        %v424 = vmul.f32 %v418, %v421
        %v425 = vmul.f32 %v419, %v421
        %v426 = vmul.f32 %v420, %v421
        %428 = vset.pattern.permute.xlu0 0
        %429 = vperm.xlu0 %428, %v306
        %v430 = vpop.permute.xlu0 %429
        %433 = vset.pattern.permute.xlu0 0
        %434 = vperm.xlu0 %433, %v307
        %v435 = vpop.permute.xlu0 %434
        %438 = vset.pattern.permute.xlu0 0
        %439 = vperm.xlu0 %438, %v308
        %v440 = vpop.permute.xlu0 %439
        %443 = vset.pattern.permute.xlu0 0
        %444 = vperm.xlu0 %443, %v309
        %v445 = vpop.permute.xlu0 %444
        %448 = vset.pattern.permute.xlu0 0
        %449 = vperm.xlu0 %448, %v310
        %v450 = vpop.permute.xlu0 %449
        %v452 = vmul.f32 %v430, %v284
        %v453 = vmul.f32 %v435, %v286
        %v454 = vmul.f32 %v440, %v289
        %v455 = vmul.f32 %v445, %v291
        %v456 = vmul.f32 %v450, %v294
        %v457 = vsub.f32 1.0, %v306
        %v458 = vsub.f32 1.0, %v307
        %v459 = vsub.f32 1.0, %v308
        %v460 = vsub.f32 1.0, %v309
        %v461 = vsub.f32 1.0, %v310
        %463 = vset.pattern.permute.xlu0 0
        %464 = vperm.xlu0 %463, %v457
        %v465 = vpop.permute.xlu0 %464
        %468 = vset.pattern.permute.xlu0 0
        %469 = vperm.xlu0 %468, %v458
        %v470 = vpop.permute.xlu0 %469
        %473 = vset.pattern.permute.xlu0 0
        %474 = vperm.xlu0 %473, %v459
        %v475 = vpop.permute.xlu0 %474
        %478 = vset.pattern.permute.xlu0 0
        %479 = vperm.xlu0 %478, %v460
        %v480 = vpop.permute.xlu0 %479
        %483 = vset.pattern.permute.xlu0 0
        %484 = vperm.xlu0 %483, %v461
        %v485 = vpop.permute.xlu0 %484
        %v487 = vmul.f32 %v465, %v422
        %v488 = vmul.f32 %v470, %v423
        %v489 = vmul.f32 %v475, %v424
        %v490 = vmul.f32 %v480, %v425
        %v491 = vmul.f32 %v485, %v426
        %v492 = vadd.f32 %v452, %v487
        %v493 = vadd.f32 %v453, %v488
        %v494 = vadd.f32 %v454, %v489
        %v495 = vadd.f32 %v455, %v490
        %v496 = vadd.f32 %v456, %v491
        %497 = vset.pattern.permute.xlu0 1
        %498 = vperm.xlu0 %497, %v306
        %v499 = vpop.permute.xlu0 %498
        %501 = vset.pattern.permute.xlu0 1
        %502 = vperm.xlu0 %501, %v307
        %v503 = vpop.permute.xlu0 %502
        %505 = vset.pattern.permute.xlu0 1
        %506 = vperm.xlu0 %505, %v308
        %v507 = vpop.permute.xlu0 %506
        %509 = vset.pattern.permute.xlu0 1
        %510 = vperm.xlu0 %509, %v309
        %v511 = vpop.permute.xlu0 %510
        %513 = vset.pattern.permute.xlu0 1
        %514 = vperm.xlu0 %513, %v310
        %v515 = vpop.permute.xlu0 %514
        %v517 = vmul.f32 %v499, %v492
        %v518 = vmul.f32 %v503, %v493
        %v519 = vmul.f32 %v507, %v494
        %v520 = vmul.f32 %v511, %v495
        %v521 = vmul.f32 %v515, %v496
        %522 = vset.pattern.permute.xlu0 2
        %523 = vperm.xlu0 %522, %v306
        %v524 = vpop.permute.xlu0 %523
        %526 = vset.pattern.permute.xlu0 2
        %527 = vperm.xlu0 %526, %v307
        %v528 = vpop.permute.xlu0 %527
        %530 = vset.pattern.permute.xlu0 2
        %531 = vperm.xlu0 %530, %v308
        %v532 = vpop.permute.xlu0 %531
        %534 = vset.pattern.permute.xlu0 2
        %535 = vperm.xlu0 %534, %v309
        %v536 = vpop.permute.xlu0 %535
        %538 = vset.pattern.permute.xlu0 2
        %539 = vperm.xlu0 %538, %v310
        %v540 = vpop.permute.xlu0 %539
        %v542 = vadd.f32 %v517, %v524
        %v543 = vadd.f32 %v518, %v528
        %v544 = vadd.f32 %v519, %v532
        %v545 = vadd.f32 %v520, %v536
        %v546 = vadd.f32 %v521, %v540
        %v547 = vpack.c.bf16 %v542, %v542
        %v548 = vpack.c.bf16 %v543, %v543
        %v549 = vpack.c.bf16 %v544, %v544
        %v550 = vpack.c.bf16 %v545, %v545
        %v551 = vpack.c.bf16 %v546, %v546
        %vm552 = vcmask 519168
        %553 = vst.msk [vmem:[%s217] sm:$0xf] %vm552, %v547
        %554 = vst.msk [vmem:[%s217 + $0x4] sm:$0xf] %vm552, %v548
        %555 = vst.msk [vmem:[%s217 + $0x8] sm:$0xf] %vm552, %v549
        %556 = vst.msk [vmem:[%s217 + $0xc] sm:$0xf] %vm552, %v550
        %557 = vst.msk [vmem:[%s217 + $0x10] sm:$0xf] %vm552, %v551
        %s558 = sand.u32 %s137, 1
        %s559 = scalar_lea.sflag [#allocation3], %s558
        %s560 = sand.u32 %s137, 1
        %s561 = smul.addr %s560, 20
        %s562 = scalar_lea.vmem [#allocation2], %s561
        // Predicated region
        $region41: #{tpu_custom_call.1} parent=39 // pred_check
          %p563 = pneg %p147
        $region42: #{tpu_custom_call.1} parent=39 // pred_check_branch
          %565 = sbr.rel (%p563) target = $region44
        $region43: #{tpu_custom_call.1} parent=39 // pred_region
          %567 = vsyncadd %s559, 0
          %s568 = smul.addr %s19, 5
          %s569 = smul.addr %s568, 4
          %s570 = scalar_lea.hbm %s5, %s569
          %s571 = sshll.u32 %s562, 4
          %s572 = int_to_ptr.vmem [resolvable:$true] %s571
          %s573 = sshll.u32 %s570, 4
          %s574 = int_to_ptr.hbm [resolvable:$true] %s573
          %579 = dma.vmem_to_hbm [thread:$0]  %s572, 320, %s574, %s559, 64, 64, 4
        $region44: #{tpu_custom_call.1} parent=39 // pred_fallthru
          _
      $region40: #{tpu_custom_call.1} parent=5 // pred_fallthru
        _
      %p580 = scmp.le.s32.totalorder 2, %s14
      // Predicated region
      $region45: #{tpu_custom_call.1} parent=5 // pred_check
        %p581 = pneg %p580
      $region46: #{tpu_custom_call.1} parent=5 // pred_check_branch
        %583 = sbr.rel (%p581) target = $region48
      $region47: #{tpu_custom_call.1} parent=5 // pred_region
        %s584 = ssub.s32 %s14, 2
        // Predicated region
        $region49: #{tpu_custom_call.1} parent=47 // pred_check
          %p585 = pneg %p153
        $region50: #{tpu_custom_call.1} parent=47 // pred_check_branch
          %587 = sbr.rel (%p585) target = $region52
        $region51: #{tpu_custom_call.1} parent=47 // pred_region
          %s588 = sand.u32 %s138, 1
          %s589 = scalar_lea.sflag [#allocation3], %s588
          %s590 = sand.u32 %s138, 1
          %s591 = smul.addr %s590, 20
          %s592 = scalar_lea.vmem [#allocation2], %s591
          %594 = dma.done %s589, 320
        $region52: #{tpu_custom_call.1} parent=47 // pred_fallthru
          _
      $region48: #{tpu_custom_call.1} parent=5 // pred_fallthru
        _
    $region6: #{tpu_custom_call.1} parent=1 // loop_footer
      %s18 = sadd.s32 1, %s14
    $region7: #{tpu_custom_call.1} parent=1 // loop_footer_branch
      %13 = sbr.rel target = $region3
    $region8: #{tpu_custom_call.1} parent=1 // loop_exit
      _
    %595 = vsyncpa [#allocation3], 1
    %s596 = scalar_lea.sflag [#allocation3], 1
    %597 = vsyncpa %s596, 1

</llo_original>
